<compile_context>
chip_gen: v7x
topology: tpu7x:2x2x1
jax: 0.10.0
libtpu: 0.0.40
codegen_flags: <defaults>
</compile_context>

<pallas_src>
import functools

import jax
import jax.numpy as jnp
from jax.experimental import pallas as pl
from jax.experimental.pallas import tpu as pltpu


def _ntxent_epilogue(g, loss_ref, batch, temperature):
    """g: (2B, 2B) f32 un-normalized Gram of z = [zis; zjs]. Writes scalar loss."""
    two_b = 2 * batch
    r = jax.lax.broadcasted_iota(jnp.int32, (two_b, two_b), 0)
    c = jax.lax.broadcasted_iota(jnp.int32, (two_b, two_b), 1)

    # Squared L2 norms live on the Gram diagonal.  F.normalize divides by
    # max(||x||, 1e-12)  ==  multiply by rsqrt(max(||x||^2, 1e-24)).
    diag_only = jnp.where(r == c, g, 0.0)
    inv_row = jax.lax.rsqrt(
        jnp.maximum(jnp.sum(diag_only, axis=-1, keepdims=True), 1e-24))  # (2B,1)
    inv_col = jax.lax.rsqrt(
        jnp.maximum(jnp.sum(diag_only, axis=0, keepdims=True), 1e-24))   # (1,2B)

    # Cosine similarities, pre-scaled by 1/T.
    s = g * inv_row * inv_col * (1.0 / temperature)                      # (2B,2B)

    # Row i < B is zis[i]; column B + j is zjs[j].
    is_zj_col = c >= batch
    is_pos = c == (r + batch)            # diagonal of the zi·zj quadrant

    positives = jnp.sum(jnp.where(is_pos, s, 0.0), axis=-1, keepdims=True)
    negatives = jnp.where(jnp.logical_and(is_zj_col, jnp.logical_not(is_pos)),
                          s, -jnp.inf)
    m = jnp.max(negatives, axis=-1, keepdims=True)
    lse = m + jnp.log(jnp.sum(jnp.exp(negatives - m), axis=-1, keepdims=True))

    per_row = -positives + lse                                           # (2B,1)
    is_zi_row = jax.lax.broadcasted_iota(jnp.int32, (two_b, 1), 0) < batch
    loss_ref[0, 0] = jnp.sum(jnp.where(is_zi_row, per_row, 0.0)) / batch


def _ntxent_single_kernel(z_ref, loss_ref, *, batch, temperature):
    """Whole problem in VMEM: one Gram + epilogue, no grid, no scratch."""
    z = z_ref[...]                                           # (2B, D) f32
    # Contract last dims (z @ z.T) without a materialized transpose.
    g = jax.lax.dot_general(z, z,
                            dimension_numbers=(((1,), (1,)), ((), ())),
                            preferred_element_type=jnp.float32)
    _ntxent_epilogue(g, loss_ref, batch, temperature)


def _ntxent_tiled_kernel(z_ref, loss_ref, g_acc, *, batch, temperature):
    """Large-D fallback: accumulate the (2B,2B) Gram over D tiles."""
    k = pl.program_id(0)

    @pl.when(k == 0)
    def _():
        g_acc[...] = jnp.zeros_like(g_acc)

    z = z_ref[...]                                           # (2B, tk) f32
    g_acc[...] += jax.lax.dot_general(z, z,
                                      dimension_numbers=(((1,), (1,)), ((), ())),
                                      preferred_element_type=jnp.float32)

    @pl.when(k == pl.num_programs(0) - 1)
    def _():
        _ntxent_epilogue(g_acc[...], loss_ref, batch, temperature)


def ntxent_loss1(zis, zjs, temperature, *, d_tile=None,
                 vmem_single_shot_bytes=16 * 1024 * 1024):
    """Pallas implementation of NTXentLoss1.forward (returns scalar loss)."""
    B = int(zis.shape[0])
    zi = zis.reshape(B, -1).astype(jnp.float32)
    zj = zjs.reshape(B, -1).astype(jnp.float32)
    # Stack both views: one input DMA stream, one MXU Gram gives sims + norms.
    z = jnp.concatenate([zi, zj], axis=0)                    # (2B, D)
    two_b, d = z.shape

    kern_kwargs = dict(batch=B, temperature=float(temperature))
    out_shape = jax.ShapeDtypeStruct((1, 1), jnp.float32)
    out_spec = pl.BlockSpec(memory_space=pltpu.MemorySpace.SMEM)

    if d_tile is None and z.size * z.dtype.itemsize <= vmem_single_shot_bytes:
        # Single kernel invocation: no grid, no accumulators.
        out = pl.pallas_call(
            functools.partial(_ntxent_single_kernel, **kern_kwargs),
            out_shape=out_shape,
            in_specs=[pl.BlockSpec(memory_space=pltpu.MemorySpace.VMEM)],
            out_specs=out_spec,
        )(z)
    else:
        # D-reduction grid with big tiles to amortize per-step overhead.
        tk = int(d_tile) if d_tile is not None else 4096
        tk = max(128, min(tk, pl.cdiv(d, 128) * 128))
        d_pad = pl.cdiv(d, tk) * tk
        if d_pad != d:
            z = jnp.pad(z, ((0, 0), (0, d_pad - d)))  # zeros leave Gram/norms unchanged
        out = pl.pallas_call(
            functools.partial(_ntxent_tiled_kernel, **kern_kwargs),
            out_shape=out_shape,
            grid_spec=pltpu.PrefetchScalarGridSpec(
                num_scalar_prefetch=0,
                grid=(d_pad // tk,),
                in_specs=[pl.BlockSpec((two_b, tk), lambda k: (0, k))],
                out_specs=out_spec,
                scratch_shapes=[pltpu.VMEM((two_b, two_b), jnp.float32)]),
            compiler_params=pltpu.CompilerParams(
                dimension_semantics=("arbitrary",)),
        )(z)
    return out[0, 0]


def _reference(zis, zjs, temperature):
    B = zis.shape[0]
    zi = zis.reshape(B, -1).astype(jnp.float32)
    zj = zjs.reshape(B, -1).astype(jnp.float32)
    zi = zi / jnp.maximum(jnp.linalg.norm(zi, axis=-1, keepdims=True), 1e-12)
    zj = zj / jnp.maximum(jnp.linalg.norm(zj, axis=-1, keepdims=True), 1e-12)
    sim = zi @ zj.T
    pos = jnp.diag(sim) / temperature
    mask = ~jnp.eye(B, dtype=bool)
    neg = (sim[mask].reshape(B, B - 1)) / temperature
    loss = -pos + jax.scipy.special.logsumexp(neg, axis=-1)
    return loss.mean()


if __name__ == "__main__":
    # NTXentLoss1(device, batch_size=8, temperature=0.5); inputs (8, 4, 16, 16).
    batch_size = 8
    temperature = 0.5

    key = jax.random.PRNGKey(0)
    k1, k2 = jax.random.split(key)
    zis = jax.random.normal(k1, (batch_size, 4, 16, 16), dtype=jnp.float32)
    zjs = jax.random.normal(k2, (batch_size, 4, 16, 16), dtype=jnp.float32)

    ref = _reference(zis, zjs, temperature)

    # Primary (single-shot, grid-less) path.
    loss = jax.block_until_ready(ntxent_loss1(zis, zjs, temperature))
    assert jnp.allclose(loss, ref, rtol=1e-5, atol=1e-5), (loss, ref)

    # Exercise the large-D tiled fallback path as well (forced small tile).
    loss_tiled = jax.block_until_ready(
        ntxent_loss1(zis, zjs, temperature, d_tile=512))
    assert jnp.allclose(loss_tiled, ref, rtol=1e-5, atol=1e-5), (loss_tiled, ref)

    print("KERNEL_OK")
</pallas_src>

<mosaic_0001>
module attributes {stable_mosaic.version = 11 : i64} {
  func.func @_ntxent_single_kernel(%arg0: memref<16x1024xf32, #tpu.memory_space<vmem>>, %arg1: memref<1x1xf32, #tpu.memory_space<smem>>) attributes {dimension_semantics = [], scalar_prefetch = 0 : i64, scratch_operands = 0 : i64, tpu.core_type = #tpu.core_type<tc>} {
    %c0 = arith.constant 0 : index
    %c0_0 = arith.constant 0 : index
    %0 = vector.load %arg0[%c0, %c0_0] : memref<16x1024xf32, #tpu.memory_space<vmem>>, vector<16x1024xf32>
    %cst = arith.constant dense<0.000000e+00> : vector<16x16xf32>
    %1 = tpu.matmul %0, %0, %cst {dimension_numbers = #tpu.dot_dimension_numbers<[1], [1], [0], [0], [0, 0, 1, 0], [], []>} : vector<16x1024xf32>, vector<16x1024xf32>, vector<16x16xf32> -> vector<16x16xf32>
    %2 = tpu.iota {dimensions = array<i32: 0>} : vector<16x16xi32>
    %3 = tpu.iota {dimensions = array<i32: 1>} : vector<16x16xi32>
    %4 = arith.cmpi eq, %2, %3 : vector<16x16xi32>
    %cst_1 = arith.constant 0.000000e+00 : f32
    %5 = vector.broadcast %cst_1 : f32 to vector<16x16xf32>
    %6 = arith.select %4, %1, %5 : vector<16x16xi1>, vector<16x16xf32>
    %cst_2 = arith.constant dense<0.000000e+00> : vector<16xf32>
    %7 = vector.multi_reduction <add>, %6, %cst_2 [1] : vector<16x16xf32> to vector<16xf32>
    %8 = vector.shape_cast %7 : vector<16xf32> to vector<16x1xf32>
    %cst_3 = arith.constant 1.000000e-24 : f32
    %9 = vector.broadcast %cst_3 : f32 to vector<16x1xf32>
    %10 = arith.maximumf %8, %9 : vector<16x1xf32>
    %11 = math.rsqrt %10 : vector<16x1xf32>
    %cst_4 = arith.constant dense<0.000000e+00> : vector<16xf32>
    %12 = vector.multi_reduction <add>, %6, %cst_4 [0] : vector<16x16xf32> to vector<16xf32>
    %13 = vector.shape_cast %12 : vector<16xf32> to vector<1x16xf32>
    %cst_5 = arith.constant 1.000000e-24 : f32
    %14 = vector.broadcast %cst_5 : f32 to vector<1x16xf32>
    %15 = arith.maximumf %13, %14 : vector<1x16xf32>
    %16 = math.rsqrt %15 : vector<1x16xf32>
    %17 = vector.broadcast %11 : vector<16x1xf32> to vector<16x16xf32>
    %18 = arith.mulf %1, %17 : vector<16x16xf32>
    %19 = vector.broadcast %16 : vector<1x16xf32> to vector<16x16xf32>
    %20 = arith.mulf %18, %19 : vector<16x16xf32>
    %cst_6 = arith.constant 2.000000e+00 : f32
    %21 = vector.broadcast %cst_6 : f32 to vector<16x16xf32>
    %22 = arith.mulf %20, %21 : vector<16x16xf32>
    %c8_i32 = arith.constant 8 : i32
    %23 = vector.broadcast %c8_i32 : i32 to vector<16x16xi32>
    %24 = arith.cmpi sge, %3, %23 : vector<16x16xi32>
    %c8_i32_7 = arith.constant 8 : i32
    %25 = vector.broadcast %c8_i32_7 : i32 to vector<16x16xi32>
    %26 = arith.addi %2, %25 : vector<16x16xi32>
    %27 = arith.cmpi eq, %3, %26 : vector<16x16xi32>
    %cst_8 = arith.constant 0.000000e+00 : f32
    %28 = vector.broadcast %cst_8 : f32 to vector<16x16xf32>
    %29 = arith.select %27, %22, %28 : vector<16x16xi1>, vector<16x16xf32>
    %cst_9 = arith.constant dense<0.000000e+00> : vector<16xf32>
    %30 = vector.multi_reduction <add>, %29, %cst_9 [1] : vector<16x16xf32> to vector<16xf32>
    %31 = vector.shape_cast %30 : vector<16xf32> to vector<16x1xf32>
    %cst_10 = arith.constant dense<true> : vector<16x16xi1>
    %32 = arith.xori %27, %cst_10 : vector<16x16xi1>
    %33 = arith.andi %24, %32 : vector<16x16xi1>
    %cst_11 = arith.constant 0xFF800000 : f32
    %34 = vector.broadcast %cst_11 : f32 to vector<16x16xf32>
    %35 = arith.select %33, %22, %34 : vector<16x16xi1>, vector<16x16xf32>
    %cst_12 = arith.constant dense<0xFF800000> : vector<16xf32>
    %36 = vector.multi_reduction <maximumf>, %35, %cst_12 [1] : vector<16x16xf32> to vector<16xf32>
    %37 = vector.shape_cast %36 : vector<16xf32> to vector<16x1xf32>
    %38 = vector.broadcast %37 : vector<16x1xf32> to vector<16x16xf32>
    %39 = arith.subf %35, %38 : vector<16x16xf32>
    %40 = math.exp %39 : vector<16x16xf32>
    %cst_13 = arith.constant dense<0.000000e+00> : vector<16xf32>
    %41 = vector.multi_reduction <add>, %40, %cst_13 [1] : vector<16x16xf32> to vector<16xf32>
    %42 = vector.shape_cast %41 : vector<16xf32> to vector<16x1xf32>
    %43 = math.log %42 : vector<16x1xf32>
    %44 = arith.addf %37, %43 : vector<16x1xf32>
    %cst_14 = arith.constant 0.000000e+00 : f32
    %45 = vector.broadcast %cst_14 : f32 to vector<16x1xf32>
    %46 = arith.subf %45, %31 : vector<16x1xf32>
    %47 = arith.addf %46, %44 : vector<16x1xf32>
    %48 = tpu.iota {dimensions = array<i32: 0>} : vector<16x1xi32>
    %c8_i32_15 = arith.constant 8 : i32
    %49 = vector.broadcast %c8_i32_15 : i32 to vector<16x1xi32>
    %50 = arith.cmpi slt, %48, %49 : vector<16x1xi32>
    %cst_16 = arith.constant 0.000000e+00 : f32
    %51 = vector.broadcast %cst_16 : f32 to vector<16x1xf32>
    %52 = arith.select %50, %47, %51 : vector<16x1xi1>, vector<16x1xf32>
    %53 = vector.shape_cast %52 : vector<16x1xf32> to vector<1x16x1xf32>
    %cst_17 = arith.constant dense<0.000000e+00> : vector<1xf32>
    %54 = vector.multi_reduction <add>, %53, %cst_17 [1, 2] : vector<1x16x1xf32> to vector<1xf32>
    %55 = vector.shape_cast %54 : vector<1xf32> to vector<1x1x1xf32>
    %56 = vector.extract %55[0, 0, 0] : f32 from vector<1x1x1xf32>
    %cst_18 = arith.constant 8.000000e+00 : f32
    %57 = arith.divf %56, %cst_18 : f32
    %c0_19 = arith.constant 0 : index
    %c0_20 = arith.constant 0 : index
    %58 = memref.load %arg1[%c0_19, %c0_20] : memref<1x1xf32, #tpu.memory_space<smem>>
    memref.store %57, %arg1[%c0_19, %c0_20] : memref<1x1xf32, #tpu.memory_space<smem>>
    return
  }
}

</mosaic_0001>

<llo_original>
// kernel: tpu_custom_call.1
$region0: #{tpu_custom_call.1}
  #allocation0 [shape = 'u32[]', space=smem, size = 0x4, offset = 0x4, fixed_abs, tag = 'smem constant byte address 0x4 - core index']
  #allocation1 [shape = 'u32[144,128]{1,0:T(1,128)}', space=vmem, size = 0x12000, scoped, tag = 'internal scratch']
  %s0 = inlined_call_operand.hbm [shape: f32[16,1024], index: 0, kind: input, shape index: {}]
  %s1 = inlined_call_operand.hbm [shape: f32[1,1], index: 1, kind: output, shape index: {}]
  %s2 = sld [smem:[#allocation0]]
  $region18: #{tpu_custom_call.1} parent=0
    _
  %s4 = ssub.s32 1, %s2
  %s5 = scalar_select 0, %s4, %s2
  $region1: #{tpu_custom_call.1} parent=0
    #allocation2 [shape = 'u8[65536]{0}', space=vmem, size = 0x10000, scoped, tag = 'input window, operand 0, single buffered']
    #allocation3 [shape = 's32[1]{0}', space=sflag, size = 0x4, scoped, tag = 'scoped memory for tpu_custom_call.1']
    #allocation4 [shape = 's32[1]{0}', space=sflag, size = 0x4, scoped, tag = 'scoped memory for tpu_custom_call.1']
    #allocation5 [shape = 'u8[512]{0}', space=smem, size = 0x200, scoped, tag = 'output window, operand 0, single buffered']
    %6 = vsyncpa [#allocation3], 0
    %7 = vsyncpa [#allocation4], 0
    // Predicated region
    $region2: #{tpu_custom_call.1} parent=1 // pred_check
      _
    $region3: #{tpu_custom_call.1} parent=1 // pred_check_branch
      %9 = sbr.rel (0) target = $region5
    $region4: #{tpu_custom_call.1} parent=1 // pred_region
      %s11 = ssub.s32 2048, 2048
      %12 = vsyncadd [#allocation3], %s11
      %s13 = sshll.u32 [#allocation2], 4
      %s14 = int_to_ptr.vmem [resolvable:$true] %s13
      %19 = dma.hbm_to_vmem [thread:$0]  %s0, 2048, %s14, [#allocation3], 1024, 1024, 64
    $region5: #{tpu_custom_call.1} parent=1 // pred_fallthru
      _
    // Predicated region
    $region6: #{tpu_custom_call.1} parent=1 // pred_check
      _
    $region7: #{tpu_custom_call.1} parent=1 // pred_check_branch
      %21 = sbr.rel (0) target = $region9
    $region8: #{tpu_custom_call.1} parent=1 // pred_region
      %22 = dma.done [#allocation3], 2048
    $region9: #{tpu_custom_call.1} parent=1 // pred_fallthru
      _
    %v23 = vld [vmem:[#allocation2] sm:$0xff]
    %v24 = vld [vmem:[#allocation2 + $0x8] sm:$0xff]
    %v25 = vld [vmem:[#allocation2 + $0x10] sm:$0xff]
    %v26 = vld [vmem:[#allocation2 + $0x18] sm:$0xff]
    %v27 = vld [vmem:[#allocation2 + $0x20] sm:$0xff]
    %v28 = vld [vmem:[#allocation2 + $0x28] sm:$0xff]
    %v29 = vld [vmem:[#allocation2 + $0x30] sm:$0xff]
    %v30 = vld [vmem:[#allocation2 + $0x38] sm:$0xff]
    %v31 = vld [vmem:[#allocation2 + $0x40] sm:$0xff]
    %v32 = vld [vmem:[#allocation2 + $0x48] sm:$0xff]
    %v33 = vld [vmem:[#allocation2 + $0x50] sm:$0xff]
    %v34 = vld [vmem:[#allocation2 + $0x58] sm:$0xff]
    %v35 = vld [vmem:[#allocation2 + $0x60] sm:$0xff]
    %v36 = vld [vmem:[#allocation2 + $0x68] sm:$0xff]
    %v37 = vld [vmem:[#allocation2 + $0x70] sm:$0xff]
    %v38 = vld [vmem:[#allocation2 + $0x78] sm:$0xff]
    %39 = vmatprep.subr.mxu0 %v24
    %40 = vmatpush1.xpose.msra.mxu0 %v23
    %41 = vmatprep.subr.mxu0 %v32
    %42 = vmatpush1.xpose.msra.mxu0 %v31
    %43 = vmatprep.subr.mxu0 0.0
    %44 = vmatpush1.xpose.msra.mxu0 0.0
    %45 = vmatprep.subr.mxu0 0.0
    %46 = vmatpush1.xpose.msra.mxu0 0.0
    %47 = vmatprep.subr.mxu0 0.0
    %48 = vmatpush1.xpose.msra.mxu0 0.0
    %49 = vmatprep.subr.mxu0 0.0
    %50 = vmatpush1.xpose.msra.mxu0 0.0
    %51 = vmatprep.subr.mxu0 0.0
    %52 = vmatpush1.xpose.msra.mxu0 0.0
    %53 = vmatprep.subr.mxu0 0.0
    %54 = vmatpush1.xpose.msra.mxu0 0.0
    %55 = vmatprep.subr.mxu0 0.0
    %56 = vmatpush1.xpose.msra.mxu0 0.0
    %57 = vmatprep.subr.mxu0 0.0
    %58 = vmatpush1.xpose.msra.mxu0 0.0
    %59 = vmatprep.subr.mxu0 0.0
    %60 = vmatpush1.xpose.msra.mxu0 0.0
    %61 = vmatprep.subr.mxu0 0.0
    %62 = vmatpush1.xpose.msra.mxu0 0.0
    %63 = vmatprep.subr.mxu0 0.0
    %64 = vmatpush1.xpose.msra.mxu0 0.0
    %65 = vmatprep.subr.mxu0 0.0
    %66 = vmatpush1.xpose.msra.mxu0 0.0
    %67 = vmatprep.subr.mxu0 0.0
    %68 = vmatpush1.xpose.msra.mxu0 0.0
    %69 = vmatprep.subr.mxu0 0.0
    %70 = vmatpush1.xpose.msra.mxu0 0.0
    %71 = vmatprep.subr.mxu0 0.0
    %72 = vmatpush1.xpose.msra.mxu0 0.0
    %73 = vmatprep.subr.mxu0 0.0
    %74 = vmatpush1.xpose.msra.mxu0 0.0
    %75 = vmatprep.subr.mxu0 0.0
    %76 = vmatpush1.xpose.msra.mxu0 0.0
    %77 = vmatprep.subr.mxu0 0.0
    %78 = vmatpush1.xpose.msra.mxu0 0.0
    %79 = vmatprep.subr.mxu0 0.0
    %80 = vmatpush1.xpose.msra.mxu0 0.0
    %81 = vmatprep.subr.mxu0 0.0
    %82 = vmatpush1.xpose.msra.mxu0 0.0
    %83 = vmatprep.subr.mxu0 0.0
    %84 = vmatpush1.xpose.msra.mxu0 0.0
    %85 = vmatprep.subr.mxu0 0.0
    %86 = vmatpush1.xpose.msra.mxu0 0.0
    %87 = vmatprep.subr.mxu0 0.0
    %88 = vmatpush1.xpose.msra.mxu0 0.0
    %89 = vmatprep.subr.mxu0 0.0
    %90 = vmatpush1.xpose.msra.mxu0 0.0
    %91 = vmatprep.subr.mxu0 0.0
    %92 = vmatpush1.xpose.msra.mxu0 0.0
    %93 = vmatprep.subr.mxu0 0.0
    %94 = vmatpush1.xpose.msra.mxu0 0.0
    %95 = vmatprep.subr.mxu0 0.0
    %96 = vmatpush1.xpose.msra.mxu0 0.0
    %97 = vmatprep.subr.mxu0 0.0
    %98 = vmatpush1.xpose.msra.mxu0 0.0
    %99 = vmatprep.subr.mxu0 0.0
    %100 = vmatpush1.xpose.msra.mxu0 0.0
    %101 = vmatprep.subr.mxu0 0.0
    %102 = vmatpush1.xpose.msra.mxu0 0.0
    %103 = vmatprep.mubr.f32.mxu0 %v24
    %104 = vmatmul.mubr.f32.gmra.mrb[0].mxu0 %v23
    %v105 = vpop.f32.mrb[0].mxu0
    %v106 = vadd.f32 0.0, %v105
    %v107 = vpop.f32.mrb[0].mxu0
    %108 = vmatprep.mubr.f32.mxu0 %v32
    %109 = vmatmul.mubr.f32.gmra.mrb[0].mxu0 %v31
    %v110 = vpop.f32.mrb[0].mxu0
    %v111 = vadd.f32 0.0, %v110
    %v112 = vpop.f32.mrb[0].mxu0
    %113 = vdwg.mxu0
    %114 = vmatprep.subr.mxu0 %v26
    %115 = vmatpush1.xpose.msra.mxu0 %v25
    %116 = vmatprep.subr.mxu0 %v34
    %117 = vmatpush1.xpose.msra.mxu0 %v33
    %118 = vmatprep.subr.mxu0 0.0
    %119 = vmatpush1.xpose.msra.mxu0 0.0
    %120 = vmatprep.subr.mxu0 0.0
    %121 = vmatpush1.xpose.msra.mxu0 0.0
    %122 = vmatprep.subr.mxu0 0.0
    %123 = vmatpush1.xpose.msra.mxu0 0.0
    %124 = vmatprep.subr.mxu0 0.0
    %125 = vmatpush1.xpose.msra.mxu0 0.0
    %126 = vmatprep.subr.mxu0 0.0
    %127 = vmatpush1.xpose.msra.mxu0 0.0
    %128 = vmatprep.subr.mxu0 0.0
    %129 = vmatpush1.xpose.msra.mxu0 0.0
    %130 = vmatprep.subr.mxu0 0.0
    %131 = vmatpush1.xpose.msra.mxu0 0.0
    %132 = vmatprep.subr.mxu0 0.0
    %133 = vmatpush1.xpose.msra.mxu0 0.0
    %134 = vmatprep.subr.mxu0 0.0
    %135 = vmatpush1.xpose.msra.mxu0 0.0
    %136 = vmatprep.subr.mxu0 0.0
    %137 = vmatpush1.xpose.msra.mxu0 0.0
    %138 = vmatprep.subr.mxu0 0.0
    %139 = vmatpush1.xpose.msra.mxu0 0.0
    %140 = vmatprep.subr.mxu0 0.0
    %141 = vmatpush1.xpose.msra.mxu0 0.0
    %142 = vmatprep.subr.mxu0 0.0
    %143 = vmatpush1.xpose.msra.mxu0 0.0
    %144 = vmatprep.subr.mxu0 0.0
    %145 = vmatpush1.xpose.msra.mxu0 0.0
    %146 = vmatprep.subr.mxu0 0.0
    %147 = vmatpush1.xpose.msra.mxu0 0.0
    %148 = vmatprep.subr.mxu0 0.0
    %149 = vmatpush1.xpose.msra.mxu0 0.0
    %150 = vmatprep.subr.mxu0 0.0
    %151 = vmatpush1.xpose.msra.mxu0 0.0
    %152 = vmatprep.subr.mxu0 0.0
    %153 = vmatpush1.xpose.msra.mxu0 0.0
    %154 = vmatprep.subr.mxu0 0.0
    %155 = vmatpush1.xpose.msra.mxu0 0.0
    %156 = vmatprep.subr.mxu0 0.0
    %157 = vmatpush1.xpose.msra.mxu0 0.0
    %158 = vmatprep.subr.mxu0 0.0
    %159 = vmatpush1.xpose.msra.mxu0 0.0
    %160 = vmatprep.subr.mxu0 0.0
    %161 = vmatpush1.xpose.msra.mxu0 0.0
    %162 = vmatprep.subr.mxu0 0.0
    %163 = vmatpush1.xpose.msra.mxu0 0.0
    %164 = vmatprep.subr.mxu0 0.0
    %165 = vmatpush1.xpose.msra.mxu0 0.0
    %166 = vmatprep.subr.mxu0 0.0
    %167 = vmatpush1.xpose.msra.mxu0 0.0
    %168 = vmatprep.subr.mxu0 0.0
    %169 = vmatpush1.xpose.msra.mxu0 0.0
    %170 = vmatprep.subr.mxu0 0.0
    %171 = vmatpush1.xpose.msra.mxu0 0.0
    %172 = vmatprep.subr.mxu0 0.0
    %173 = vmatpush1.xpose.msra.mxu0 0.0
    %174 = vmatprep.subr.mxu0 0.0
    %175 = vmatpush1.xpose.msra.mxu0 0.0
    %176 = vmatprep.subr.mxu0 0.0
    %177 = vmatpush1.xpose.msra.mxu0 0.0
    %178 = vmatprep.mubr.f32.mxu0 %v26
    %179 = vmatmul.mubr.f32.gmra.mrb[0].mxu0 %v25
    %v180 = vpop.f32.mrb[0].mxu0
    %v181 = vadd.f32 %v106, %v180
    %v182 = vpop.f32.mrb[0].mxu0
    %183 = vmatprep.mubr.f32.mxu0 %v34
    %184 = vmatmul.mubr.f32.gmra.mrb[0].mxu0 %v33
    %v185 = vpop.f32.mrb[0].mxu0
    %v186 = vadd.f32 %v111, %v185
    %v187 = vpop.f32.mrb[0].mxu0
    %188 = vdwg.mxu0
    %189 = vmatprep.subr.mxu0 %v28
    %190 = vmatpush1.xpose.msra.mxu0 %v27
    %191 = vmatprep.subr.mxu0 %v36
    %192 = vmatpush1.xpose.msra.mxu0 %v35
    %193 = vmatprep.subr.mxu0 0.0
    %194 = vmatpush1.xpose.msra.mxu0 0.0
    %195 = vmatprep.subr.mxu0 0.0
    %196 = vmatpush1.xpose.msra.mxu0 0.0
    %197 = vmatprep.subr.mxu0 0.0
    %198 = vmatpush1.xpose.msra.mxu0 0.0
    %199 = vmatprep.subr.mxu0 0.0
    %200 = vmatpush1.xpose.msra.mxu0 0.0
    %201 = vmatprep.subr.mxu0 0.0
    %202 = vmatpush1.xpose.msra.mxu0 0.0
    %203 = vmatprep.subr.mxu0 0.0
    %204 = vmatpush1.xpose.msra.mxu0 0.0
    %205 = vmatprep.subr.mxu0 0.0
    %206 = vmatpush1.xpose.msra.mxu0 0.0
    %207 = vmatprep.subr.mxu0 0.0
    %208 = vmatpush1.xpose.msra.mxu0 0.0
    %209 = vmatprep.subr.mxu0 0.0
    %210 = vmatpush1.xpose.msra.mxu0 0.0
    %211 = vmatprep.subr.mxu0 0.0
    %212 = vmatpush1.xpose.msra.mxu0 0.0
    %213 = vmatprep.subr.mxu0 0.0
    %214 = vmatpush1.xpose.msra.mxu0 0.0
    %215 = vmatprep.subr.mxu0 0.0
    %216 = vmatpush1.xpose.msra.mxu0 0.0
    %217 = vmatprep.subr.mxu0 0.0
    %218 = vmatpush1.xpose.msra.mxu0 0.0
    %219 = vmatprep.subr.mxu0 0.0
    %220 = vmatpush1.xpose.msra.mxu0 0.0
    %221 = vmatprep.subr.mxu0 0.0
    %222 = vmatpush1.xpose.msra.mxu0 0.0
    %223 = vmatprep.subr.mxu0 0.0
    %224 = vmatpush1.xpose.msra.mxu0 0.0
    %225 = vmatprep.subr.mxu0 0.0
    %226 = vmatpush1.xpose.msra.mxu0 0.0
    %227 = vmatprep.subr.mxu0 0.0
    %228 = vmatpush1.xpose.msra.mxu0 0.0
    %229 = vmatprep.subr.mxu0 0.0
    %230 = vmatpush1.xpose.msra.mxu0 0.0
    %231 = vmatprep.subr.mxu0 0.0
    %232 = vmatpush1.xpose.msra.mxu0 0.0
    %233 = vmatprep.subr.mxu0 0.0
    %234 = vmatpush1.xpose.msra.mxu0 0.0
    %235 = vmatprep.subr.mxu0 0.0
    %236 = vmatpush1.xpose.msra.mxu0 0.0
    %237 = vmatprep.subr.mxu0 0.0
    %238 = vmatpush1.xpose.msra.mxu0 0.0
    %239 = vmatprep.subr.mxu0 0.0
    %240 = vmatpush1.xpose.msra.mxu0 0.0
    %241 = vmatprep.subr.mxu0 0.0
    %242 = vmatpush1.xpose.msra.mxu0 0.0
    %243 = vmatprep.subr.mxu0 0.0
    %244 = vmatpush1.xpose.msra.mxu0 0.0
    %245 = vmatprep.subr.mxu0 0.0
    %246 = vmatpush1.xpose.msra.mxu0 0.0
    %247 = vmatprep.subr.mxu0 0.0
    %248 = vmatpush1.xpose.msra.mxu0 0.0
    %249 = vmatprep.subr.mxu0 0.0
    %250 = vmatpush1.xpose.msra.mxu0 0.0
    %251 = vmatprep.subr.mxu0 0.0
    %252 = vmatpush1.xpose.msra.mxu0 0.0
    %253 = vmatprep.mubr.f32.mxu0 %v28
    %254 = vmatmul.mubr.f32.gmra.mrb[0].mxu0 %v27
    %v255 = vpop.f32.mrb[0].mxu0
    %v256 = vadd.f32 %v181, %v255
    %v257 = vpop.f32.mrb[0].mxu0
    %258 = vmatprep.mubr.f32.mxu0 %v36
    %259 = vmatmul.mubr.f32.gmra.mrb[0].mxu0 %v35
    %v260 = vpop.f32.mrb[0].mxu0
    %v261 = vadd.f32 %v186, %v260
    %v262 = vpop.f32.mrb[0].mxu0
    %263 = vdwg.mxu0
    %264 = vmatprep.subr.mxu0 %v30
    %265 = vmatpush1.xpose.msra.mxu0 %v29
    %266 = vmatprep.subr.mxu0 %v38
    %267 = vmatpush1.xpose.msra.mxu0 %v37
    %268 = vmatprep.subr.mxu0 0.0
    %269 = vmatpush1.xpose.msra.mxu0 0.0
    %270 = vmatprep.subr.mxu0 0.0
    %271 = vmatpush1.xpose.msra.mxu0 0.0
    %272 = vmatprep.subr.mxu0 0.0
    %273 = vmatpush1.xpose.msra.mxu0 0.0
    %274 = vmatprep.subr.mxu0 0.0
    %275 = vmatpush1.xpose.msra.mxu0 0.0
    %276 = vmatprep.subr.mxu0 0.0
    %277 = vmatpush1.xpose.msra.mxu0 0.0
    %278 = vmatprep.subr.mxu0 0.0
    %279 = vmatpush1.xpose.msra.mxu0 0.0
    %280 = vmatprep.subr.mxu0 0.0
    %281 = vmatpush1.xpose.msra.mxu0 0.0
    %282 = vmatprep.subr.mxu0 0.0
    %283 = vmatpush1.xpose.msra.mxu0 0.0
    %284 = vmatprep.subr.mxu0 0.0
    %285 = vmatpush1.xpose.msra.mxu0 0.0
    %286 = vmatprep.subr.mxu0 0.0
    %287 = vmatpush1.xpose.msra.mxu0 0.0
    %288 = vmatprep.subr.mxu0 0.0
    %289 = vmatpush1.xpose.msra.mxu0 0.0
    %290 = vmatprep.subr.mxu0 0.0
    %291 = vmatpush1.xpose.msra.mxu0 0.0
    %292 = vmatprep.subr.mxu0 0.0
    %293 = vmatpush1.xpose.msra.mxu0 0.0
    %294 = vmatprep.subr.mxu0 0.0
    %295 = vmatpush1.xpose.msra.mxu0 0.0
    %296 = vmatprep.subr.mxu0 0.0
    %297 = vmatpush1.xpose.msra.mxu0 0.0
    %298 = vmatprep.subr.mxu0 0.0
    %299 = vmatpush1.xpose.msra.mxu0 0.0
    %300 = vmatprep.subr.mxu0 0.0
    %301 = vmatpush1.xpose.msra.mxu0 0.0
    %302 = vmatprep.subr.mxu0 0.0
    %303 = vmatpush1.xpose.msra.mxu0 0.0
    %304 = vmatprep.subr.mxu0 0.0
    %305 = vmatpush1.xpose.msra.mxu0 0.0
    %306 = vmatprep.subr.mxu0 0.0
    %307 = vmatpush1.xpose.msra.mxu0 0.0
    %308 = vmatprep.subr.mxu0 0.0
    %309 = vmatpush1.xpose.msra.mxu0 0.0
    %310 = vmatprep.subr.mxu0 0.0
    %311 = vmatpush1.xpose.msra.mxu0 0.0
    %312 = vmatprep.subr.mxu0 0.0
    %313 = vmatpush1.xpose.msra.mxu0 0.0
    %314 = vmatprep.subr.mxu0 0.0
    %315 = vmatpush1.xpose.msra.mxu0 0.0
    %316 = vmatprep.subr.mxu0 0.0
    %317 = vmatpush1.xpose.msra.mxu0 0.0
    %318 = vmatprep.subr.mxu0 0.0
    %319 = vmatpush1.xpose.msra.mxu0 0.0
    %320 = vmatprep.subr.mxu0 0.0
    %321 = vmatpush1.xpose.msra.mxu0 0.0
    %322 = vmatprep.subr.mxu0 0.0
    %323 = vmatpush1.xpose.msra.mxu0 0.0
    %324 = vmatprep.subr.mxu0 0.0
    %325 = vmatpush1.xpose.msra.mxu0 0.0
    %326 = vmatprep.subr.mxu0 0.0
    %327 = vmatpush1.xpose.msra.mxu0 0.0
    %328 = vmatprep.mubr.f32.mxu0 %v30
    %329 = vmatmul.mubr.f32.gmra.mrb[0].mxu0 %v29
    %v330 = vpop.f32.mrb[0].mxu0
    %v331 = vadd.f32 %v256, %v330
    %v332 = vpop.f32.mrb[0].mxu0
    %333 = vmatprep.mubr.f32.mxu0 %v38
    %334 = vmatmul.mubr.f32.gmra.mrb[0].mxu0 %v37
    %v335 = vpop.f32.mrb[0].mxu0
    %v336 = vadd.f32 %v261, %v335
    %v337 = vpop.f32.mrb[0].mxu0
    %338 = vdwg.mxu0
    %v339 = vlaneseq
    %v340 = vshrl.u32 %v339, 7
    %v341 = vadd.s32 %v340, 8
    %v342 = vlaneseq
    %v343 = vand.u32 %v342, 127
    %vm344 = vcmp.eq.s32.totalorder %v340, %v343
    %vm345 = vcmp.eq.s32.totalorder %v341, %v343
    %v346 = vsel %vm344, %v331, 0.0
    %v347 = vsel %vm345, %v336, 0.0
    %vm348 = vcmask 130048
    %v349 = vsel %vm348, %v346, 0.0
    %350 = vadd.xlane.f32.xlu0 %v349
    %v351 = vpop.xlane.xlu0 %350
    %v352 = vsel %vm348, %v347, 0.0
    %353 = vadd.xlane.f32.xlu0 %v352
    %v354 = vpop.xlane.xlu0 %353
    %v355 = vmax.f32 %v351, 1e-24
    %v356 = vmax.f32 %v354, 1e-24
    %v357 = vrsqrt.pop %v355
    %v358 = vrsqrt.pop %v356
    %v359 = vadd.f32 %v349, %v352
    %v360 = vrot.slane %v359, 4
    %v361 = vadd.f32 %v359, %v360
    %v362 = vrot.slane %v361, 2
    %v363 = vadd.f32 %v361, %v362
    %v364 = vrot.slane %v363, 1
    %v365 = vadd.f32 %v363, %v364
    %v366 = vmax.f32 %v365, 1e-24
    %v367 = vrsqrt.pop %v366
    %v368 = vmul.f32 %v331, %v357
    %v369 = vmul.f32 %v336, %v358
    %v370 = vmul.f32 %v368, %v367
    %v371 = vmul.f32 %v369, %v367
    %v372 = vmul.f32 %v370, 2.0
    %v373 = vmul.f32 %v371, 2.0
    %vm374 = vcmp.ge.s32.totalorder %v343, 8
    %v375 = vadd.s32 %v341, 8
    %vm376 = vcmp.eq.s32.totalorder %v343, %v341
    %vm377 = vcmp.eq.s32.totalorder %v343, %v375
    %v378 = vsel %vm376, %v372, 0.0
    %v379 = vsel %vm377, %v373, 0.0
    %v380 = vsel %vm348, %v378, 0.0
    %381 = vadd.xlane.f32.xlu0 %v380
    %v382 = vpop.xlane.xlu0 %381
    %v383 = vsel %vm348, %v379, 0.0
    %384 = vadd.xlane.f32.xlu0 %v383
    %v385 = vpop.xlane.xlu0 %384
    %vm386 = vmxor %vm376, 1
    %vm387 = vmxor %vm377, 1
    %vm388 = vmand %vm374, %vm386
    %vm389 = vmand %vm374, %vm387
    %v390 = vsel %vm388, %v372, -inf
    %v391 = vsel %vm389, %v373, -inf
    %v392 = vsel %vm348, %v390, -inf
    %393 = vmax.xlane.f32.xlu0 %v392
    %v394 = vpop.xlane.xlu0 %393
    %v395 = vsel %vm348, %v391, -inf
    %396 = vmax.xlane.f32.xlu0 %v395
    %v397 = vpop.xlane.xlu0 %396
    %v398 = vsub.f32 %v390, %v394
    %v399 = vsub.f32 %v391, %v397
    %v400 = vmul.f32 %v398, 1.442695
    %v401 = vpow.pop %v400
    %v402 = vmul.f32 %v399, 1.442695
    %v403 = vpow.pop %v402
    %v404 = vsel %vm348, %v401, 0.0
    %405 = vadd.xlane.f32.xlu0 %v404
    %v406 = vpop.xlane.xlu0 %405
    %v407 = vsel %vm348, %v403, 0.0
    %408 = vadd.xlane.f32.xlu0 %v407
    %v409 = vpop.xlane.xlu0 %408
    %v410 = vlog2.pop %v406
    %v411 = vmul.f32 %v410, 0.6931472
    %v412 = vlog2.pop %v409
    %v413 = vmul.f32 %v412, 0.6931472
    %v414 = vadd.f32 %v394, %v411
    %v415 = vadd.f32 %v397, %v413
    %v416 = vsub.f32 0.0, %v382
    %v417 = vsub.f32 0.0, %v385
    %v418 = vadd.f32 %v416, %v414
    %v419 = vadd.f32 %v417, %v415
    %vm420 = vcmp.lt.s32.totalorder %v340, 8
    %vm421 = vcmp.lt.s32.totalorder %v341, 8
    %v422 = vsel %vm420, %v418, 0.0
    %v423 = vsel %vm421, %v419, 0.0
    %vm424 = vcmask 7168
    %v425 = vsel %vm424, %v422, 0.0
    %v426 = vsel %vm424, %v423, 0.0
    %v427 = vadd.f32 %v425, %v426
    %428 = vadd.xlane.f32.xlu0 %v427
    %v429 = vpop.xlane.xlu0 %428
    %v430 = vrot.slane %v429, 4
    %v431 = vadd.f32 %v429, %v430
    %v432 = vrot.slane %v431, 2
    %v433 = vadd.f32 %v431, %v432
    %v434 = vrot.slane %v433, 1
    %v435 = vadd.f32 %v433, %v434
    %s436 = vtos %v435
    %v437 = vrcp.pop 8.0
    %s438 = vtos %v437
    %s439 = smul.f32 %s436, %s438
    %s440 = scalar_lea.smem [#allocation5], 0
    %441 = sst [smem:[%s440]] %s439
    // Predicated region
    $region10: #{tpu_custom_call.1} parent=1 // pred_check
      _
    $region11: #{tpu_custom_call.1} parent=1 // pred_check_branch
      %443 = sbr.rel (0) target = $region13
    $region12: #{tpu_custom_call.1} parent=1 // pred_region
      %s445 = ssub.s32 16, 16
      %446 = vsyncadd [#allocation4], %s445
      %449 = dma.smem_to_hbm [#allocation5], 16, %s1, [#allocation4]
    $region13: #{tpu_custom_call.1} parent=1 // pred_fallthru
      _
    // Predicated region
    $region14: #{tpu_custom_call.1} parent=1 // pred_check
      _
    $region15: #{tpu_custom_call.1} parent=1 // pred_check_branch
      %451 = sbr.rel (0) target = $region17
    $region16: #{tpu_custom_call.1} parent=1 // pred_region
      %452 = dma.done [#allocation4], 16
    $region17: #{tpu_custom_call.1} parent=1 // pred_fallthru
      _
    %453 = sfence
    %454 = vsyncpa [#allocation3], 1
    %455 = vsyncpa [#allocation4], 1

</llo_original>
